<compile_context>
chip_gen: v5e
topology: v5e:2x2
jax: 0.10.0
libtpu: 0.0.40
codegen_flags: <defaults>
</compile_context>

<pallas_src>
import functools

import jax
import jax.numpy as jnp
from jax.experimental import pallas as pl
from jax.experimental.pallas import tpu as pltpu

_LANE = 128      # vreg lane width  (last-dim granularity)
_SUBLANE = 8     # vreg sublane width (second-to-last dim granularity)


def _round_up(x, m):
    return ((x + m - 1) // m) * m


def _pick_batch_tile(B8):
    """Pick a batch tile from a ladder.

    Prefers (a) >=2 grid tiles when the batch permits (so the "parallel" axis
    can shard across v7x's 2 TensorCores) and (b) padding waste <= ~12.5%;
    falls back to the minimal-waste tile.  B8 is the sublane-rounded batch.
    """
    ladder = (512, 256, 128, 64, 32, 16, 8)
    cands = [
        t for t in ladder
        if t <= B8 and not (B8 >= 2 * _SUBLANE and _round_up(B8, t) // t < 2)
    ]
    if not cands:
        return _SUBLANE
    for t in cands:                                   # descending: biggest first
        if _round_up(B8, t) - B8 <= B8 // 8:
            return t
    return min(cands, key=lambda t: _round_up(B8, t) - B8)


def _fused_mlp_kernel(x_ref, *refs):
    """Whole MLP in one kernel: chain of (bf16 matmul -> f32 bias [-> tanh]).

    Intermediate activations never leave VMEM/vregs.
    """
    o_ref = refs[-1]
    wb_refs = refs[:-1]
    n_layers = len(wb_refs) // 2

    h = x_ref[...].astype(jnp.float32)                  # (tb, d_in) f32
    for i in range(n_layers):
        w = wb_refs[2 * i][...]                         # bf16 (k, n_pad)
        b = wb_refs[2 * i + 1][...]                     # f32  (1, n_pad)
        # bf16 operands feed the MXU at native rate; accumulation stays f32.
        h = jnp.dot(h.astype(jnp.bfloat16), w,
                    preferred_element_type=jnp.float32) + b
        if i != n_layers - 1:                           # hidden layers: tanh (EUP)
            h = jnp.tanh(h)
    o_ref[...] = h.astype(o_ref.dtype)


def fused_mlp_pallas(x_pad, w_pads, b_pads, *, batch_tile):
    """Run the fused MLP.  x_pad: (B_pad, d_in) f32 with B_pad % batch_tile == 0.

    Weights are bf16, lane-padded to 128 on hidden/output dims (layer 0 keeps
    the true input dim on its K axis).  Biases are f32, shape (1, n_pad).
    """
    B_pad, d_in = x_pad.shape
    d_out = w_pads[-1].shape[1]
    assert B_pad % batch_tile == 0
    grid = (B_pad // batch_tile,)

    in_specs = [pl.BlockSpec((batch_tile, d_in), lambda i: (i, 0))]
    args = [x_pad]
    for w, b in zip(w_pads, b_pads):
        # Whole-array blocks with constant index_map -> weights/biases stay the
        # same resident block across all batch tiles (no per-tile refetch).
        in_specs.append(pl.BlockSpec(w.shape, lambda i: (0, 0)))
        in_specs.append(pl.BlockSpec(b.shape, lambda i: (0, 0)))
        args.extend([w, b])

    out_specs = pl.BlockSpec((batch_tile, d_out), lambda i: (i, 0))

    # Advisory cost estimate so the XLA scheduler can overlap neighbors.
    flops = 2 * B_pad * sum(w.shape[0] * w.shape[1] for w in w_pads)
    transcendentals = B_pad * sum(w.shape[1] for w in w_pads[:-1])
    bytes_accessed = (
        x_pad.size * x_pad.dtype.itemsize
        + sum(w.size * w.dtype.itemsize for w in w_pads)
        + sum(b.size * b.dtype.itemsize for b in b_pads)
        + B_pad * d_out * 4
    )

    # Explicit VMEM budget: double-buffered x/out tiles + (double-buffered)
    # weights/biases + activation working set, with headroom.  v5e's default
    # scoped limit is only 16 MiB; v7x has 64 MiB physical, so cap well below.
    wb_bytes = (sum(w.size * w.dtype.itemsize for w in w_pads)
                + sum(b.size * b.dtype.itemsize for b in b_pads))
    widest = max(max(w.shape) for w in w_pads)
    tile_bytes = 2 * batch_tile * (d_in + d_out) * 4
    act_bytes = 4 * batch_tile * widest * 4
    vmem_limit = min(2 * (wb_bytes + tile_bytes + act_bytes) + (8 << 20), 56 << 20)

    return pl.pallas_call(
        _fused_mlp_kernel,
        out_shape=jax.ShapeDtypeStruct((B_pad, d_out), jnp.float32),
        grid=grid,
        in_specs=in_specs,
        out_specs=out_specs,
        compiler_params=pltpu.CompilerParams(
            dimension_semantics=("parallel",),     # batch tiles shard across TCs
            vmem_limit_bytes=vmem_limit),
        cost_estimate=pl.CostEstimate(
            flops=flops,
            transcendentals=transcendentals,
            bytes_accessed=bytes_accessed),
    )(*args)


@functools.partial(jax.jit, static_argnames=("batch_tile", "output_size"))
def _mlp_forward(x, w_pads, b_pads, *, batch_tile, output_size):
    """Jitted end-to-end forward: pad batch -> fused kernel -> slice output."""
    B = x.shape[0]
    B8 = _round_up(max(B, _SUBLANE), _SUBLANE)
    B_pad = _round_up(B8, batch_tile)
    x_pad = jnp.pad(x.astype(jnp.float32), ((0, B_pad - B), (0, 0)))
    out_pad = fused_mlp_pallas(x_pad, w_pads, b_pads, batch_tile=batch_tile)
    return out_pad[:B, :output_size]


def xavier_uniform(key, fan_in, fan_out, dtype=jnp.float32):
    # Matches torch.nn.init.xavier_uniform_ (gain=1.0).
    limit = jnp.sqrt(6.0 / (fan_in + fan_out))
    return jax.random.uniform(
        key, (fan_in, fan_out), dtype=dtype, minval=-limit, maxval=limit
    )


class MLP:
    """JAX/Pallas port of hw4 MLP: n_layers hidden tanh layers + linear output."""

    def __init__(self, input_size, output_size, n_layers, size, key,
                 output_activation=None):
        self.input_size = input_size
        self.output_size = output_size
        self.n_layers = n_layers
        self.size = size
        self.output_activation = output_activation

        layers_size = [input_size] + [size] * n_layers + [output_size]
        keys = jax.random.split(key, len(layers_size) - 1)

        self.weights = []        # unpadded f32, (fan_in, fan_out) — reference use
        self.biases = []         # unpadded f32, (fan_out,)
        w_pads, b_pads = [], []
        for i in range(len(layers_size) - 1):
            fan_in, fan_out = layers_size[i], layers_size[i + 1]
            w = xavier_uniform(keys[i], fan_in, fan_out)
            b = jnp.zeros((fan_out,), jnp.float32)
            self.weights.append(w)
            self.biases.append(b)

            # Layer 0 keeps the true input dim on its K axis (x is read with
            # its real feature width -> no 8x zero-padding HBM traffic).
            # Hidden/output lane dims are padded to 128; the padding is exact
            # (padded rows/cols and biases are zero, tanh(0)=0).
            fi_p = fan_in if i == 0 else _round_up(fan_in, _LANE)
            fo_p = _round_up(fan_out, _LANE)
            w_pad = jnp.zeros((fi_p, fo_p), jnp.float32).at[:fan_in, :fan_out].set(w)
            b_pad = jnp.zeros((1, fo_p), jnp.float32).at[0, :fan_out].set(b)
            # MXU is bf16-native: store weights bf16, accumulate f32 in-kernel.
            w_pads.append(w_pad.astype(jnp.bfloat16))
            b_pads.append(b_pad)

        self._w_pad = tuple(w_pads)
        self._b_pad = tuple(b_pads)

    def __call__(self, x):
        B, d = x.shape
        assert d == self.input_size
        B8 = _round_up(max(B, _SUBLANE), _SUBLANE)
        batch_tile = _pick_batch_tile(B8)
        out = _mlp_forward(x, self._w_pad, self._b_pad,
                           batch_tile=batch_tile, output_size=self.output_size)
        if self.output_activation is not None:
            out = self.output_activation(out)
        return out


if __name__ == "__main__":
    key = jax.random.PRNGKey(0)
    k_param, k_x = jax.random.split(key)

    batch = 8
    input_size = 16
    output_size = 8
    n_layers = 2
    hidden_size = 32

    mlp = MLP(input_size, output_size, n_layers, hidden_size, key=k_param)
    x = jax.random.normal(k_x, (batch, input_size), dtype=jnp.float32)

    y = mlp(x)
    jax.block_until_ready(y)

    # Sanity check against a pure-JAX f32 reference of the same math (unpadded).
    ref = x
    for i in range(len(mlp.weights)):
        ref = ref @ mlp.weights[i] + mlp.biases[i]
        if i != len(mlp.weights) - 1:
            ref = jnp.tanh(ref)

    assert y.shape == (batch, output_size)
    # bf16 MXU operands (f32 accumulation) -> relaxed tolerance vs f32 reference.
    assert jnp.allclose(y, ref, atol=5e-2, rtol=5e-2)

    print("KERNEL_OK")
</pallas_src>

<mosaic_0001>
module attributes {stable_mosaic.version = 11 : i64} {
  func.func @_fused_mlp_kernel(%arg0: i32, %arg1: memref<8x16xf32, #tpu.memory_space<vmem>>, %arg2: memref<16x128xbf16, #tpu.memory_space<vmem>>, %arg3: memref<1x128xf32, #tpu.memory_space<vmem>>, %arg4: memref<128x128xbf16, #tpu.memory_space<vmem>>, %arg5: memref<1x128xf32, #tpu.memory_space<vmem>>, %arg6: memref<128x128xbf16, #tpu.memory_space<vmem>>, %arg7: memref<1x128xf32, #tpu.memory_space<vmem>>, %arg8: memref<8x128xf32, #tpu.memory_space<vmem>>) attributes {dimension_semantics = [#tpu.dimension_semantics<parallel>], iteration_bounds = array<i64: 1>, scalar_prefetch = 0 : i64, scratch_operands = 0 : i64, tpu.core_type = #tpu.core_type<tc>, window_params = [{transform_indices = @transform_0, window_bounds = array<i64: 8, 16>}, {pipeline_mode = #tpu.pipeline_mode<synchronous>, transform_indices = @transform_1, window_bounds = array<i64: 16, 128>}, {pipeline_mode = #tpu.pipeline_mode<synchronous>, transform_indices = @transform_2, window_bounds = array<i64: 1, 128>}, {pipeline_mode = #tpu.pipeline_mode<synchronous>, transform_indices = @transform_3, window_bounds = array<i64: 128, 128>}, {pipeline_mode = #tpu.pipeline_mode<synchronous>, transform_indices = @transform_4, window_bounds = array<i64: 1, 128>}, {pipeline_mode = #tpu.pipeline_mode<synchronous>, transform_indices = @transform_5, window_bounds = array<i64: 128, 128>}, {pipeline_mode = #tpu.pipeline_mode<synchronous>, transform_indices = @transform_6, window_bounds = array<i64: 1, 128>}, {transform_indices = @transform_7, window_bounds = array<i64: 8, 128>}]} {
    %c0 = arith.constant 0 : index
    %c0_0 = arith.constant 0 : index
    %0 = vector.load %arg1[%c0, %c0_0] : memref<8x16xf32, #tpu.memory_space<vmem>>, vector<8x16xf32>
    %c0_1 = arith.constant 0 : index
    %c0_2 = arith.constant 0 : index
    %1 = vector.load %arg2[%c0_1, %c0_2] : memref<16x128xbf16, #tpu.memory_space<vmem>>, vector<16x128xbf16>
    %c0_3 = arith.constant 0 : index
    %c0_4 = arith.constant 0 : index
    %2 = vector.load %arg3[%c0_3, %c0_4] : memref<1x128xf32, #tpu.memory_space<vmem>>, vector<1x128xf32>
    %3 = arith.truncf %0 : vector<8x16xf32> to vector<8x16xbf16>
    %cst = arith.constant dense<0.000000e+00> : vector<8x128xf32>
    %4 = tpu.matmul %3, %1, %cst {dimension_numbers = #tpu.dot_dimension_numbers<[1], [0], [0], [1], [0, 0, 1, 1], [], []>} : vector<8x16xbf16>, vector<16x128xbf16>, vector<8x128xf32> -> vector<8x128xf32>
    %5 = vector.broadcast %2 : vector<1x128xf32> to vector<8x128xf32>
    %6 = arith.addf %4, %5 : vector<8x128xf32>
    %7 = math.tanh %6 : vector<8x128xf32>
    %c0_5 = arith.constant 0 : index
    %c0_6 = arith.constant 0 : index
    %8 = vector.load %arg4[%c0_5, %c0_6] : memref<128x128xbf16, #tpu.memory_space<vmem>>, vector<128x128xbf16>
    %c0_7 = arith.constant 0 : index
    %c0_8 = arith.constant 0 : index
    %9 = vector.load %arg5[%c0_7, %c0_8] : memref<1x128xf32, #tpu.memory_space<vmem>>, vector<1x128xf32>
    %10 = arith.truncf %7 : vector<8x128xf32> to vector<8x128xbf16>
    %cst_9 = arith.constant dense<0.000000e+00> : vector<8x128xf32>
    %11 = tpu.matmul %10, %8, %cst_9 {dimension_numbers = #tpu.dot_dimension_numbers<[1], [0], [0], [1], [0, 0, 1, 1], [], []>} : vector<8x128xbf16>, vector<128x128xbf16>, vector<8x128xf32> -> vector<8x128xf32>
    %12 = vector.broadcast %9 : vector<1x128xf32> to vector<8x128xf32>
    %13 = arith.addf %11, %12 : vector<8x128xf32>
    %14 = math.tanh %13 : vector<8x128xf32>
    %c0_10 = arith.constant 0 : index
    %c0_11 = arith.constant 0 : index
    %15 = vector.load %arg6[%c0_10, %c0_11] : memref<128x128xbf16, #tpu.memory_space<vmem>>, vector<128x128xbf16>
    %c0_12 = arith.constant 0 : index
    %c0_13 = arith.constant 0 : index
    %16 = vector.load %arg7[%c0_12, %c0_13] : memref<1x128xf32, #tpu.memory_space<vmem>>, vector<1x128xf32>
    %17 = arith.truncf %14 : vector<8x128xf32> to vector<8x128xbf16>
    %cst_14 = arith.constant dense<0.000000e+00> : vector<8x128xf32>
    %18 = tpu.matmul %17, %15, %cst_14 {dimension_numbers = #tpu.dot_dimension_numbers<[1], [0], [0], [1], [0, 0, 1, 1], [], []>} : vector<8x128xbf16>, vector<128x128xbf16>, vector<8x128xf32> -> vector<8x128xf32>
    %19 = vector.broadcast %16 : vector<1x128xf32> to vector<8x128xf32>
    %20 = arith.addf %18, %19 : vector<8x128xf32>
    %c0_15 = arith.constant 0 : index
    %c0_16 = arith.constant 0 : index
    %21 = vector.load %arg8[%c0_15, %c0_16] : memref<8x128xf32, #tpu.memory_space<vmem>>, vector<8x128xf32>
    tpu.vector_store %arg8[%c0_15, %c0_16], %20 {strides = array<i32>} : memref<8x128xf32, #tpu.memory_space<vmem>>, vector<8x128xf32>,
    return
  }
  func.func @transform_0(%arg0: i32) -> (i32, i32) {
    %c0_i32 = arith.constant 0 : i32
    %c0_i32_0 = arith.constant 0 : i32
    return %arg0, %c0_i32 : i32, i32
  }
  func.func @transform_1(%arg0: i32) -> (i32, i32) {
    %c0_i32 = arith.constant 0 : i32
    %c0_i32_0 = arith.constant 0 : i32
    %c0_i32_1 = arith.constant 0 : i32
    return %c0_i32, %c0_i32_0 : i32, i32
  }
  func.func @transform_2(%arg0: i32) -> (i32, i32) {
    %c0_i32 = arith.constant 0 : i32
    %c0_i32_0 = arith.constant 0 : i32
    %c0_i32_1 = arith.constant 0 : i32
    return %c0_i32, %c0_i32_0 : i32, i32
  }
  func.func @transform_3(%arg0: i32) -> (i32, i32) {
    %c0_i32 = arith.constant 0 : i32
    %c0_i32_0 = arith.constant 0 : i32
    %c0_i32_1 = arith.constant 0 : i32
    return %c0_i32, %c0_i32_0 : i32, i32
  }
  func.func @transform_4(%arg0: i32) -> (i32, i32) {
    %c0_i32 = arith.constant 0 : i32
    %c0_i32_0 = arith.constant 0 : i32
    %c0_i32_1 = arith.constant 0 : i32
    return %c0_i32, %c0_i32_0 : i32, i32
  }
  func.func @transform_5(%arg0: i32) -> (i32, i32) {
    %c0_i32 = arith.constant 0 : i32
    %c0_i32_0 = arith.constant 0 : i32
    %c0_i32_1 = arith.constant 0 : i32
    return %c0_i32, %c0_i32_0 : i32, i32
  }
  func.func @transform_6(%arg0: i32) -> (i32, i32) {
    %c0_i32 = arith.constant 0 : i32
    %c0_i32_0 = arith.constant 0 : i32
    %c0_i32_1 = arith.constant 0 : i32
    return %c0_i32, %c0_i32_0 : i32, i32
  }
  func.func @transform_7(%arg0: i32) -> (i32, i32) {
    %c0_i32 = arith.constant 0 : i32
    %c0_i32_0 = arith.constant 0 : i32
    return %arg0, %c0_i32 : i32, i32
  }
}

</mosaic_0001>

<llo_original>
// kernel: _mlp_forward.1
$region0: #{_mlp_forward.1}
  #allocation0 [shape = 'u32[]', space=smem, size = 0x4, offset = 0x4, fixed_abs, tag = 'smem constant byte address 0x4 - core index']
  #allocation1 [shape = 'u32[72,128]{1,0:T(1,128)}', space=vmem, size = 0x9000, scoped, tag = 'internal scratch']
  %s0 = inlined_call_operand.hbm [shape: f32[8,16], index: 0, kind: input, shape index: {}]
  %s1 = inlined_call_operand.hbm [shape: bf16[16,128], index: 1, kind: input, shape index: {}]
  %s2 = inlined_call_operand.vmem [shape: f32[1,128], index: 2, kind: input, shape index: {}]
  %s3 = inlined_call_operand.hbm [shape: bf16[128,128], index: 3, kind: input, shape index: {}]
  %s4 = inlined_call_operand.vmem [shape: f32[1,128], index: 4, kind: input, shape index: {}]
  %s5 = inlined_call_operand.hbm [shape: bf16[128,128], index: 5, kind: input, shape index: {}]
  %s6 = inlined_call_operand.vmem [shape: f32[1,128], index: 6, kind: input, shape index: {}]
  %s7 = inlined_call_operand.hbm [shape: f32[8,128], index: 7, kind: output, shape index: {}]
  %s8 = sld [smem:[#allocation0]]
  $region54: #{_mlp_forward.1} parent=0
    _
  %s10 = ssub.s32 1, %s8
  %s11 = scalar_select 0, %s10, %s8
  $region1: #{_mlp_forward.1} parent=0
    #allocation2 [shape = 'u8[4096]{0}', space=vmem, size = 0x1000, scoped, tag = 'input window, operand 0, single buffered']
    #allocation3 [shape = 's32[1]{0}', space=sflag, size = 0x4, scoped, tag = 'scoped memory for _mlp_forward.1']
    #allocation4 [shape = 's32[1]{0}', space=sflag, size = 0x4, scoped, tag = 'scoped memory for _mlp_forward.1']
    #allocation5 [shape = 'u8[4096]{0}', space=vmem, size = 0x1000, scoped, tag = 'input window, operand 1, single buffered']
    #allocation6 [shape = 's32[1]{0}', space=sflag, size = 0x4, scoped, tag = 'scoped memory for _mlp_forward.1']
    #allocation7 [shape = 'u8[32768]{0}', space=vmem, size = 0x8000, scoped, tag = 'input window, operand 3, single buffered']
    #allocation8 [shape = 'u8[32768]{0}', space=vmem, size = 0x8000, scoped, tag = 'input window, operand 5, single buffered']
    #allocation9 [shape = 's32[1]{0}', space=sflag, size = 0x4, scoped, tag = 'scoped memory for _mlp_forward.1']
    #allocation10 [shape = 'u8[4096]{0}', space=vmem, size = 0x1000, scoped, tag = 'output window, operand 0, single buffered']
    %12 = vsyncpa [#allocation3], 0
    %13 = vsyncpa [#allocation6], 0
    %14 = vsyncpa [#allocation9], 0
    %15 = vsyncpa [#allocation4], 0
    // Predicated region
    $region2: #{_mlp_forward.1} parent=1 // pred_check
      _
    $region3: #{_mlp_forward.1} parent=1 // pred_check_branch
      %17 = sbr.rel (0) target = $region5
    $region4: #{_mlp_forward.1} parent=1 // pred_region
      %19 = vsyncadd [#allocation3], 0
      %s21 = sshll.u32 %s0, 4
      %s22 = int_to_ptr.hbm [resolvable:$true] %s21
      %s23 = sshll.u32 [#allocation2], 4
      %s24 = int_to_ptr.vmem [resolvable:$true] %s23
      %26 = dma.hbm_to_vmem [thread:$0]  %s22, 128, %s24, [#allocation3]
    $region5: #{_mlp_forward.1} parent=1 // pred_fallthru
      _
    // Predicated region
    $region6: #{_mlp_forward.1} parent=1 // pred_check
      _
    $region7: #{_mlp_forward.1} parent=1 // pred_check_branch
      %28 = sbr.rel (0) target = $region9
    $region8: #{_mlp_forward.1} parent=1 // pred_region
      %30 = vsyncadd [#allocation6], 0
      %s31 = sshll.u32 %s1, 4
      %s32 = int_to_ptr.hbm [resolvable:$true] %s31
      %s33 = sshll.u32 [#allocation5], 4
      %s34 = int_to_ptr.vmem [resolvable:$true] %s33
      %39 = dma.hbm_to_vmem [thread:$0]  %s32, 128, %s34, [#allocation6], 64, 64, 4
    $region9: #{_mlp_forward.1} parent=1 // pred_fallthru
      _
    // Predicated region
    $region10: #{_mlp_forward.1} parent=1 // pred_check
      _
    $region11: #{_mlp_forward.1} parent=1 // pred_check_branch
      %41 = sbr.rel (0) target = $region13
    $region12: #{_mlp_forward.1} parent=1 // pred_region
      _
    $region13: #{_mlp_forward.1} parent=1 // pred_fallthru
      _
    // Predicated region
    $region14: #{_mlp_forward.1} parent=1 // pred_check
      _
    $region15: #{_mlp_forward.1} parent=1 // pred_check_branch
      %43 = sbr.rel (0) target = $region17
    $region16: #{_mlp_forward.1} parent=1 // pred_region
      %45 = vsyncadd [#allocation6], 0
      %s46 = sshll.u32 %s3, 4
      %s47 = int_to_ptr.hbm [resolvable:$true] %s46
      %s48 = sshll.u32 [#allocation7], 4
      %s49 = int_to_ptr.vmem [resolvable:$true] %s48
      %54 = dma.hbm_to_vmem [thread:$0]  %s47, 1024, %s49, [#allocation6], 64, 64, 4
    $region17: #{_mlp_forward.1} parent=1 // pred_fallthru
      _
    // Predicated region
    $region18: #{_mlp_forward.1} parent=1 // pred_check
      _
    $region19: #{_mlp_forward.1} parent=1 // pred_check_branch
      %56 = sbr.rel (0) target = $region21
    $region20: #{_mlp_forward.1} parent=1 // pred_region
      _
    $region21: #{_mlp_forward.1} parent=1 // pred_fallthru
      _
    // Predicated region
    $region22: #{_mlp_forward.1} parent=1 // pred_check
      _
    $region23: #{_mlp_forward.1} parent=1 // pred_check_branch
      %58 = sbr.rel (0) target = $region25
    $region24: #{_mlp_forward.1} parent=1 // pred_region
      %60 = vsyncadd [#allocation9], 0
      %s61 = sshll.u32 %s5, 4
      %s62 = int_to_ptr.hbm [resolvable:$true] %s61
      %s63 = sshll.u32 [#allocation8], 4
      %s64 = int_to_ptr.vmem [resolvable:$true] %s63
      %69 = dma.hbm_to_vmem [thread:$0]  %s62, 1024, %s64, [#allocation9], 64, 64, 4
    $region25: #{_mlp_forward.1} parent=1 // pred_fallthru
      _
    // Predicated region
    $region26: #{_mlp_forward.1} parent=1 // pred_check
      _
    $region27: #{_mlp_forward.1} parent=1 // pred_check_branch
      %71 = sbr.rel (0) target = $region29
    $region28: #{_mlp_forward.1} parent=1 // pred_region
      _
    $region29: #{_mlp_forward.1} parent=1 // pred_fallthru
      _
    // Predicated region
    $region30: #{_mlp_forward.1} parent=1 // pred_check
      _
    $region31: #{_mlp_forward.1} parent=1 // pred_check_branch
      %73 = sbr.rel (0) target = $region33
    $region32: #{_mlp_forward.1} parent=1 // pred_region
      %75 = dma.done [#allocation3], 128
    $region33: #{_mlp_forward.1} parent=1 // pred_fallthru
      _
    // Predicated region
    $region34: #{_mlp_forward.1} parent=1 // pred_check
      _
    $region35: #{_mlp_forward.1} parent=1 // pred_check_branch
      %77 = sbr.rel (0) target = $region37
    $region36: #{_mlp_forward.1} parent=1 // pred_region
      %79 = dma.done [#allocation6], 128
    $region37: #{_mlp_forward.1} parent=1 // pred_fallthru
      _
    // Predicated region
    $region38: #{_mlp_forward.1} parent=1 // pred_check
      _
    $region39: #{_mlp_forward.1} parent=1 // pred_check_branch
      %81 = sbr.rel (0) target = $region41
    $region40: #{_mlp_forward.1} parent=1 // pred_region
      %83 = dma.done [#allocation6], 1024
    $region41: #{_mlp_forward.1} parent=1 // pred_fallthru
      _
    // Predicated region
    $region42: #{_mlp_forward.1} parent=1 // pred_check
      _
    $region43: #{_mlp_forward.1} parent=1 // pred_check_branch
      %85 = sbr.rel (0) target = $region45
    $region44: #{_mlp_forward.1} parent=1 // pred_region
      %87 = dma.done [#allocation9], 1024
    $region45: #{_mlp_forward.1} parent=1 // pred_fallthru
      _
    %v89 = vld [vmem:[#allocation2] sm:$0xff]
    %v90 = vld [vmem:[#allocation5] sm:$0xf]
    %v91 = vld [vmem:[#allocation5 + $0x4] sm:$0xf]
    %v92 = vld [vmem:[%s2] sm:$0x1]
    %v93 = vpack.c.bf16 %v89, %v89
    %v95 = vperm.slane %v92, 0
    %v99 = vunpack.c.l.b16 %v90
    %v100 = vunpack.c.l.b16 %v91
    %v101 = vpack.c.b16 %v100, %v99
    %vm103 = vcmask 130048
    %v105 = vsel %vm103, %v93, 0
    %107 = vmatpush.bf16.msra.mxu0 0
    %108 = vmatpush.bf16.msra.mxu0 0
    %109 = vmatpush.bf16.msra.mxu0 0
    %110 = vmatpush.bf16.msra.mxu0 0
    %111 = vmatpush.bf16.msra.mxu0 0
    %112 = vmatpush.bf16.msra.mxu0 0
    %113 = vmatpush.bf16.msra.mxu0 0
    %114 = vmatpush.bf16.msra.mxu0 %v101
    %115 = vmatmul.bf16.gmra.mxu0 %v105
    %v116 = vpop.f32.mrf.mxu0
    %v117 = vadd.f32 %v95, %v116
    %v118 = vpop.f32.mrf.mxu0
    %119 = vdwg.mxu0
    %v120 = vtanh.pop %v117
    %v121 = vld [vmem:[#allocation7] sm:$0xf]
    %v122 = vld [vmem:[#allocation7 + $0x4] sm:$0xf]
    %v123 = vld [vmem:[#allocation7 + $0x8] sm:$0xf]
    %v124 = vld [vmem:[#allocation7 + $0xc] sm:$0xf]
    %v125 = vld [vmem:[#allocation7 + $0x10] sm:$0xf]
    %v126 = vld [vmem:[#allocation7 + $0x14] sm:$0xf]
    %v127 = vld [vmem:[#allocation7 + $0x18] sm:$0xf]
    %v128 = vld [vmem:[#allocation7 + $0x1c] sm:$0xf]
    %v129 = vld [vmem:[#allocation7 + $0x20] sm:$0xf]
    %v130 = vld [vmem:[#allocation7 + $0x24] sm:$0xf]
    %v131 = vld [vmem:[#allocation7 + $0x28] sm:$0xf]
    %v132 = vld [vmem:[#allocation7 + $0x2c] sm:$0xf]
    %v133 = vld [vmem:[#allocation7 + $0x30] sm:$0xf]
    %v134 = vld [vmem:[#allocation7 + $0x34] sm:$0xf]
    %v135 = vld [vmem:[#allocation7 + $0x38] sm:$0xf]
    %v136 = vld [vmem:[#allocation7 + $0x3c] sm:$0xf]
    %v137 = vld [vmem:[%s4] sm:$0x1]
    %v138 = vpack.c.bf16 %v120, %v120
    %v140 = vperm.slane %v137, 0
    %v158 = vunpack.c.l.b16 %v121
    %v159 = vunpack.c.l.b16 %v122
    %v160 = vunpack.c.l.b16 %v123
    %v161 = vunpack.c.l.b16 %v124
    %v162 = vunpack.c.l.b16 %v125
    %v163 = vunpack.c.l.b16 %v126
    %v164 = vunpack.c.l.b16 %v127
    %v165 = vunpack.c.l.b16 %v128
    %v166 = vunpack.c.l.b16 %v129
    %v167 = vunpack.c.l.b16 %v130
    %v168 = vunpack.c.l.b16 %v131
    %v169 = vunpack.c.l.b16 %v132
    %v170 = vunpack.c.l.b16 %v133
    %v171 = vunpack.c.l.b16 %v134
    %v172 = vunpack.c.l.b16 %v135
    %v173 = vunpack.c.l.b16 %v136
    %v174 = vpack.c.b16 %v159, %v158
    %v175 = vpack.c.b16 %v161, %v160
    %v176 = vpack.c.b16 %v163, %v162
    %v177 = vpack.c.b16 %v165, %v164
    %v178 = vpack.c.b16 %v167, %v166
    %v179 = vpack.c.b16 %v169, %v168
    %v180 = vpack.c.b16 %v171, %v170
    %v181 = vpack.c.b16 %v173, %v172
    %190 = vmatpush.bf16.msra.mxu0 %v181
    %191 = vmatpush.bf16.msra.mxu0 %v180
    %192 = vmatpush.bf16.msra.mxu0 %v179
    %193 = vmatpush.bf16.msra.mxu0 %v178
    %194 = vmatpush.bf16.msra.mxu0 %v177
    %195 = vmatpush.bf16.msra.mxu0 %v176
    %196 = vmatpush.bf16.msra.mxu0 %v175
    %197 = vmatpush.bf16.msra.mxu0 %v174
    %198 = vmatmul.bf16.gmra.mxu0 %v138
    %v199 = vpop.f32.mrf.mxu0
    %v200 = vadd.f32 %v140, %v199
    %v201 = vpop.f32.mrf.mxu0
    %202 = vdwg.mxu0
    %v203 = vtanh.pop %v200
    %v204 = vld [vmem:[#allocation8] sm:$0xf]
    %v205 = vld [vmem:[#allocation8 + $0x4] sm:$0xf]
    %v206 = vld [vmem:[#allocation8 + $0x8] sm:$0xf]
    %v207 = vld [vmem:[#allocation8 + $0xc] sm:$0xf]
    %v208 = vld [vmem:[#allocation8 + $0x10] sm:$0xf]
    %v209 = vld [vmem:[#allocation8 + $0x14] sm:$0xf]
    %v210 = vld [vmem:[#allocation8 + $0x18] sm:$0xf]
    %v211 = vld [vmem:[#allocation8 + $0x1c] sm:$0xf]
    %v212 = vld [vmem:[#allocation8 + $0x20] sm:$0xf]
    %v213 = vld [vmem:[#allocation8 + $0x24] sm:$0xf]
    %v214 = vld [vmem:[#allocation8 + $0x28] sm:$0xf]
    %v215 = vld [vmem:[#allocation8 + $0x2c] sm:$0xf]
    %v216 = vld [vmem:[#allocation8 + $0x30] sm:$0xf]
    %v217 = vld [vmem:[#allocation8 + $0x34] sm:$0xf]
    %v218 = vld [vmem:[#allocation8 + $0x38] sm:$0xf]
    %v219 = vld [vmem:[#allocation8 + $0x3c] sm:$0xf]
    %v220 = vld [vmem:[%s6] sm:$0x1]
    %v221 = vpack.c.bf16 %v203, %v203
    %v223 = vperm.slane %v220, 0
    %v241 = vunpack.c.l.b16 %v204
    %v242 = vunpack.c.l.b16 %v205
    %v243 = vunpack.c.l.b16 %v206
    %v244 = vunpack.c.l.b16 %v207
    %v245 = vunpack.c.l.b16 %v208
    %v246 = vunpack.c.l.b16 %v209
    %v247 = vunpack.c.l.b16 %v210
    %v248 = vunpack.c.l.b16 %v211
    %v249 = vunpack.c.l.b16 %v212
    %v250 = vunpack.c.l.b16 %v213
    %v251 = vunpack.c.l.b16 %v214
    %v252 = vunpack.c.l.b16 %v215
    %v253 = vunpack.c.l.b16 %v216
    %v254 = vunpack.c.l.b16 %v217
    %v255 = vunpack.c.l.b16 %v218
    %v256 = vunpack.c.l.b16 %v219
    %v257 = vpack.c.b16 %v242, %v241
    %v258 = vpack.c.b16 %v244, %v243
    %v259 = vpack.c.b16 %v246, %v245
    %v260 = vpack.c.b16 %v248, %v247
    %v261 = vpack.c.b16 %v250, %v249
    %v262 = vpack.c.b16 %v252, %v251
    %v263 = vpack.c.b16 %v254, %v253
    %v264 = vpack.c.b16 %v256, %v255
    %273 = vmatpush.bf16.msra.mxu0 %v264
    %274 = vmatpush.bf16.msra.mxu0 %v263
    %275 = vmatpush.bf16.msra.mxu0 %v262
    %276 = vmatpush.bf16.msra.mxu0 %v261
    %277 = vmatpush.bf16.msra.mxu0 %v260
    %278 = vmatpush.bf16.msra.mxu0 %v259
    %279 = vmatpush.bf16.msra.mxu0 %v258
    %280 = vmatpush.bf16.msra.mxu0 %v257
    %281 = vmatmul.bf16.gmra.mxu0 %v221
    %v282 = vpop.f32.mrf.mxu0
    %v283 = vadd.f32 %v223, %v282
    %v284 = vpop.f32.mrf.mxu0
    %285 = vdwg.mxu0
    %286 = vst [vmem:[#allocation10] sm:$0xff] %v283
    // Predicated region
    $region46: #{_mlp_forward.1} parent=1 // pred_check
      _
    $region47: #{_mlp_forward.1} parent=1 // pred_check_branch
      %288 = sbr.rel (0) target = $region49
    $region48: #{_mlp_forward.1} parent=1 // pred_region
      %290 = vsyncadd [#allocation4], 0
      %s292 = sshll.u32 [#allocation10], 4
      %s293 = int_to_ptr.vmem [resolvable:$true] %s292
      %s294 = sshll.u32 %s7, 4
      %s295 = int_to_ptr.hbm [resolvable:$true] %s294
      %297 = dma.vmem_to_hbm [thread:$0]  %s293, 128, %s295, [#allocation4]
    $region49: #{_mlp_forward.1} parent=1 // pred_fallthru
      _
    // Predicated region
    $region50: #{_mlp_forward.1} parent=1 // pred_check
      _
    $region51: #{_mlp_forward.1} parent=1 // pred_check_branch
      %299 = sbr.rel (0) target = $region53
    $region52: #{_mlp_forward.1} parent=1 // pred_region
      %301 = dma.done [#allocation4], 128
    $region53: #{_mlp_forward.1} parent=1 // pred_fallthru
      _
    %302 = vsyncpa [#allocation3], 1
    %303 = vsyncpa [#allocation6], 1
    %304 = vsyncpa [#allocation9], 1
    %305 = vsyncpa [#allocation4], 1

</llo_original>
